<compile_context>
chip_gen: v7x
topology: tpu7x:2x2x1
jax: 0.10.0
libtpu: 0.0.40
codegen_flags: <defaults>
</compile_context>

<pallas_src>
import jax
import jax.numpy as jnp
from jax import lax
from jax.experimental import pallas as pl
from jax.experimental.pallas import tpu as pltpu

_LANES = 128
_MAX_BLOCK_ROWS = 2048      # 2048 x 128 f32 = 1 MiB per input per pipeline buffer
_EPS = 1e-7
_NEG_FILL = -1e30           # neutral logit: sigmoid -> 0, bce term -> 0 (finite, no NaN)


def _round_up(x, m):
    return ((x + m - 1) // m) * m


def _num_tensorcores_per_chip():
    """Best-effort device gate: 2 only on dual-TensorCore chips (v7x); v5e/v6e are 1-TC."""
    try:
        kind = jax.devices()[0].device_kind.lower()
    except Exception:
        return 1
    return 2 if "7" in kind else 1


def _make_kernel(rows, block_rows, tiles_per_core, apply_mask):
    """Kernel factory; all tiling parameters are baked in as Python constants."""
    fold_pad = (-block_rows) % 8     # zero rows so the (-1, 8, 128) fold is exact

    def kernel(yp_ref, yt_ref, out_ref):
        t_idx = pl.program_id(1)

        @pl.when(t_idx == 0)
        def _init():
            out_ref[...] = jnp.zeros_like(out_ref)

        x = yp_ref[...].astype(jnp.float32)      # (block_rows, 128) logits
        t = yt_ref[...].astype(jnp.float32)      # (block_rows, 128) targets

        if apply_mask:
            # Ragged / clamped-duplicate blocks: rows at-or-past `rows` hold stale VMEM data.
            # Replace them with neutral values so they contribute exactly 0 to every sum.
            row0 = (pl.program_id(0) * tiles_per_core + t_idx) * block_rows
            ridx = lax.broadcasted_iota(jnp.int32, (block_rows, 1), 0) + row0
            valid = ridx < rows                                  # (block_rows, 1)
            x = jnp.where(valid, x, _NEG_FILL)
            t = jnp.where(valid, t, 0.0)

        # Shared transcendental: e = exp(-|x|) feeds both sigmoid and the BCE log term.
        e = jnp.exp(-jnp.abs(x))
        inv = pl.reciprocal(1.0 + e, approx=False)               # EUP reciprocal (exact)
        p = jnp.where(x >= 0.0, inv, e * inv)                    # sigmoid(x), overflow-safe
        # BCEWithLogits elementwise: max(x,0) - x*t + log(1 + exp(-|x|))
        bce = jnp.maximum(x, 0.0) - x * t + jnp.log1p(e)

        def fold(q):                                             # (block_rows,128) -> (8,128)
            if fold_pad:
                q = jnp.concatenate(
                    [q, jnp.zeros((fold_pad, q.shape[1]), q.dtype)], axis=0)
            return q.reshape(-1, 8, q.shape[1]).sum(axis=0)      # pure VPU vreg adds

        upd = jnp.stack([fold(p * t), fold(p), fold(t), fold(bce)], axis=0)   # (4, 8, 128)
        out_ref[...] += upd[None]                                # single full-tile RMW

    return kernel


def _as_stream(a, is_target):
    """Flatten; keep f32/bf16 dtypes as-is (upcast in-kernel) to save HBM bandwidth."""
    flat = a.reshape(-1)
    if a.dtype == jnp.float32 or a.dtype == jnp.bfloat16:
        return flat
    # {0,1} targets are exact in bf16 (half the read bandwidth); logits go to f32.
    return flat.astype(jnp.bfloat16 if is_target else jnp.float32)


@jax.jit
def dice_bce_loss(y_pred, y_true):
    """Pallas implementation of Dice_BCE_Loss.forward. Returns a scalar float32."""
    assert y_pred.shape == y_true.shape
    n = int(y_pred.size)

    yp = _as_stream(y_pred, is_target=False)
    yt = _as_stream(y_true, is_target=True)

    pad = (-n) % _LANES
    if pad:
        # Rare path (numel not a multiple of 128): neutral-pad a single partial row.
        # TODO(synk): handle this <128-element ragged tail without the host-side copy.
        yp = jnp.concatenate([yp, jnp.full((pad,), _NEG_FILL, yp.dtype)])
        yt = jnp.concatenate([yt, jnp.zeros((pad,), yt.dtype)])
    rows = (n + pad) // _LANES
    yp = yp.reshape(rows, _LANES)            # free re-layout: lane-dense slab
    yt = yt.reshape(rows, _LANES)

    # ---- tiling: balanced lane-dense blocks; 2-way core split only on dual-TC chips ----
    if rows <= _MAX_BLOCK_ROWS:
        num_cores, tiles_per_core, block_rows = 1, 1, rows       # full-dim block (always legal)
        blocks_total = 1
    else:
        blocks_min = pl.cdiv(rows, _MAX_BLOCK_ROWS)
        # Balanced block size, multiple of 32 (covers f32 (8,128) and bf16 (16,128) tiles).
        block_rows = min(_MAX_BLOCK_ROWS, _round_up(pl.cdiv(rows, blocks_min), 32))
        blocks_total = pl.cdiv(rows, block_rows)
        num_cores = min(_num_tensorcores_per_chip(), blocks_total)
        tiles_per_core = pl.cdiv(blocks_total, num_cores)

    coverage = num_cores * tiles_per_core * block_rows
    apply_mask = coverage != rows            # any ragged or clamped-duplicate block?
    max_blk = blocks_total - 1

    def in_map(c, t, T=tiles_per_core, M=max_blk):
        # Clamp so a trailing duplicate block never indexes past the array; its rows are
        # fully masked in-kernel, so it contributes nothing.
        return (jnp.minimum(c * T + t, M), 0)

    kernel = _make_kernel(rows, block_rows, tiles_per_core, apply_mask)

    partials = pl.pallas_call(
        kernel,
        out_shape=jax.ShapeDtypeStruct((num_cores, 4, 8, _LANES), jnp.float32),
        grid_spec=pltpu.PrefetchScalarGridSpec(
            num_scalar_prefetch=0,
            grid=(num_cores, tiles_per_core),
            in_specs=[
                pl.BlockSpec((block_rows, _LANES), in_map),
                pl.BlockSpec((block_rows, _LANES), in_map),
            ],
            out_specs=pl.BlockSpec((1, 4, 8, _LANES), lambda c, t: (c, 0, 0, 0)),
        ),
        compiler_params=pltpu.CompilerParams(
            dimension_semantics=("parallel", "arbitrary")),
    )(yp, yt)

    # ---- tiny epilogue: combine num_cores * 4 * 8 * 128 partials into the scalar loss ----
    sums = jnp.sum(partials, axis=(0, 2, 3))                     # (4,)
    inter, psum, tsum, bce_sum = sums[0], sums[1], sums[2], sums[3]
    card = psum + tsum                                           # sum(p) + sum(t) = sum(p + t)
    # DiceLoss(mode='binary', from_logits=True, smooth=0, eps=1e-7)
    dice_score = (2.0 * inter) / jnp.maximum(card, _EPS)
    dice_loss = (1.0 - dice_score) * (tsum > 0).astype(jnp.float32)
    # BCEWithLogitsLoss (mean over all elements)
    bce_loss = bce_sum / jnp.float32(n)
    # dice_weight = 1.0, bce_weight = 1.0
    return 1.0 * dice_loss + 1.0 * bce_loss


def _reference(y_pred, y_true):
    """Pure-JAX reference mirroring the PyTorch module exactly."""
    eps = 1e-7
    x = y_pred.astype(jnp.float32)
    t = y_true.astype(jnp.float32)
    bs = x.shape[0]
    # Dice (binary, from_logits): view as (bs, 1, -1), sum over dims (0, 2)
    p = jax.nn.sigmoid(x).reshape(bs, 1, -1)
    tt = t.reshape(bs, 1, -1)
    inter = jnp.sum(p * tt, axis=(0, 2))
    card = jnp.sum(p + tt, axis=(0, 2))
    score = (2.0 * inter) / jnp.maximum(card, eps)
    loss = 1.0 - score
    mask = (jnp.sum(tt, axis=(0, 2)) > 0).astype(loss.dtype)
    dice = jnp.mean(loss * mask)
    # BCEWithLogits (mean)
    bce = jnp.mean(jnp.maximum(x, 0.0) - x * t + jnp.log1p(jnp.exp(-jnp.abs(x))))
    return dice + bce


if __name__ == "__main__":
    key = jax.random.PRNGKey(0)
    k1, k2, k3, k4, k5, k6 = jax.random.split(key, 6)

    # Primary small case: binary segmentation logits/targets (N=2, C=1, H=W=16).
    y_pred = jax.random.normal(k1, (2, 1, 16, 16), dtype=jnp.float32)
    y_true = (jax.random.uniform(k2, (2, 1, 16, 16)) > 0.5).astype(jnp.float32)
    out = jax.block_until_ready(dice_bce_loss(y_pred, y_true))
    ref = _reference(y_pred, y_true)
    assert jnp.allclose(out, ref, rtol=1e-5, atol=1e-5), (out, ref)

    # Multi-block path with a ragged last block + bf16 targets (exercises the in-kernel
    # row mask, balanced tiling, index clamping and the narrow-dtype target stream).
    y_pred2 = jax.random.normal(k3, (2, 1, 736, 416), dtype=jnp.float32)
    y_true2 = (jax.random.uniform(k4, (2, 1, 736, 416)) > 0.5).astype(jnp.bfloat16)
    out2 = jax.block_until_ready(dice_bce_loss(y_pred2, y_true2))
    ref2 = _reference(y_pred2, y_true2)
    assert jnp.allclose(out2, ref2, rtol=1e-4, atol=1e-4), (out2, ref2)

    # Ragged element count (numel % 128 != 0) -> rare neutral-pad fallback path.
    y_pred3 = jax.random.normal(k5, (2, 3, 15, 17), dtype=jnp.float32)
    y_true3 = (jax.random.uniform(k6, (2, 3, 15, 17)) > 0.5).astype(jnp.float32)
    out3 = jax.block_until_ready(dice_bce_loss(y_pred3, y_true3))
    ref3 = _reference(y_pred3, y_true3)
    assert jnp.allclose(out3, ref3, rtol=1e-5, atol=1e-5), (out3, ref3)

    print("KERNEL_OK")
</pallas_src>

<mosaic_0001>
module attributes {stable_mosaic.version = 11 : i64} {
  func.func @kernel(%arg0: i32, %arg1: i32, %arg2: memref<4x128xf32, #tpu.memory_space<vmem>>, %arg3: memref<4x128xf32, #tpu.memory_space<vmem>>, %arg4: memref<1x4x8x128xf32, #tpu.memory_space<vmem>>) attributes {dimension_semantics = [#tpu.dimension_semantics<parallel>, #tpu.dimension_semantics<arbitrary>], iteration_bounds = array<i64: 1, 1>, scalar_prefetch = 0 : i64, scratch_operands = 0 : i64, tpu.core_type = #tpu.core_type<tc>, window_params = [{transform_indices = @transform_0, window_bounds = array<i64: 4, 128>}, {transform_indices = @transform_1, window_bounds = array<i64: 4, 128>}, {transform_indices = @transform_2, window_bounds = array<i64: 1, 4, 8, 128>}]} {
    %c0_i32 = arith.constant 0 : i32
    %0 = arith.cmpi eq, %arg1, %c0_i32 : i32
    %1 = arith.extui %0 : i1 to i32
    %c0_i32_0 = arith.constant 0 : i32
    %2 = arith.cmpi ne, %1, %c0_i32_0 : i32
    scf.if %2 {
      %cst_23 = arith.constant 0.000000e+00 : f32
      %48 = vector.broadcast %cst_23 : f32 to vector<1x4x8x128xf32>
      %c0_24 = arith.constant 0 : index
      %c0_25 = arith.constant 0 : index
      %c0_26 = arith.constant 0 : index
      %c0_27 = arith.constant 0 : index
      %49 = vector.load %arg4[%c0_24, %c0_25, %c0_26, %c0_27] : memref<1x4x8x128xf32, #tpu.memory_space<vmem>>, vector<1x4x8x128xf32>
      tpu.vector_store %arg4[%c0_24, %c0_25, %c0_26, %c0_27], %48 {strides = array<i32>} : memref<1x4x8x128xf32, #tpu.memory_space<vmem>>, vector<1x4x8x128xf32>,
    } else {
    }
    %c0 = arith.constant 0 : index
    %c0_1 = arith.constant 0 : index
    %3 = vector.load %arg2[%c0, %c0_1] : memref<4x128xf32, #tpu.memory_space<vmem>>, vector<4x128xf32>
    %c0_2 = arith.constant 0 : index
    %c0_3 = arith.constant 0 : index
    %4 = vector.load %arg3[%c0_2, %c0_3] : memref<4x128xf32, #tpu.memory_space<vmem>>, vector<4x128xf32>
    %5 = math.absf %3 : vector<4x128xf32>
    %cst = arith.constant 0.000000e+00 : f32
    %6 = vector.broadcast %cst : f32 to vector<4x128xf32>
    %7 = arith.subf %6, %5 : vector<4x128xf32>
    %8 = math.exp %7 : vector<4x128xf32>
    %cst_4 = arith.constant 1.000000e+00 : f32
    %9 = vector.broadcast %cst_4 : f32 to vector<4x128xf32>
    %10 = arith.addf %9, %8 : vector<4x128xf32>
    %11 = tpu.reciprocal %10 : vector<4x128xf32> -> vector<4x128xf32>
    %cst_5 = arith.constant 0.000000e+00 : f32
    %12 = vector.broadcast %cst_5 : f32 to vector<4x128xf32>
    %13 = arith.cmpf oge, %3, %12 : vector<4x128xf32>
    %14 = arith.mulf %8, %11 : vector<4x128xf32>
    %15 = arith.select %13, %11, %14 : vector<4x128xi1>, vector<4x128xf32>
    %cst_6 = arith.constant 0.000000e+00 : f32
    %16 = vector.broadcast %cst_6 : f32 to vector<4x128xf32>
    %17 = arith.maximumf %3, %16 : vector<4x128xf32>
    %18 = arith.mulf %3, %4 : vector<4x128xf32>
    %19 = arith.subf %17, %18 : vector<4x128xf32>
    %20 = math.log1p %8 : vector<4x128xf32>
    %21 = arith.addf %19, %20 : vector<4x128xf32>
    %22 = arith.mulf %15, %4 : vector<4x128xf32>
    %cst_7 = arith.constant 0.000000e+00 : f32
    %23 = vector.broadcast %cst_7 : f32 to vector<4x128xf32>
    %24 = tpu.concatenate %22, %23 in 0 : vector<4x128xf32>, vector<4x128xf32> -> vector<8x128xf32>
    %25 = vector.shape_cast %24 : vector<8x128xf32> to vector<1x8x128xf32>
    %cst_8 = arith.constant dense<0.000000e+00> : vector<8x128xf32>
    %26 = vector.multi_reduction <add>, %25, %cst_8 [0] : vector<1x8x128xf32> to vector<8x128xf32>
    %cst_9 = arith.constant 0.000000e+00 : f32
    %27 = vector.broadcast %cst_9 : f32 to vector<4x128xf32>
    %28 = tpu.concatenate %15, %27 in 0 : vector<4x128xf32>, vector<4x128xf32> -> vector<8x128xf32>
    %29 = vector.shape_cast %28 : vector<8x128xf32> to vector<1x8x128xf32>
    %cst_10 = arith.constant dense<0.000000e+00> : vector<8x128xf32>
    %30 = vector.multi_reduction <add>, %29, %cst_10 [0] : vector<1x8x128xf32> to vector<8x128xf32>
    %cst_11 = arith.constant 0.000000e+00 : f32
    %31 = vector.broadcast %cst_11 : f32 to vector<4x128xf32>
    %32 = tpu.concatenate %4, %31 in 0 : vector<4x128xf32>, vector<4x128xf32> -> vector<8x128xf32>
    %33 = vector.shape_cast %32 : vector<8x128xf32> to vector<1x8x128xf32>
    %cst_12 = arith.constant dense<0.000000e+00> : vector<8x128xf32>
    %34 = vector.multi_reduction <add>, %33, %cst_12 [0] : vector<1x8x128xf32> to vector<8x128xf32>
    %cst_13 = arith.constant 0.000000e+00 : f32
    %35 = vector.broadcast %cst_13 : f32 to vector<4x128xf32>
    %36 = tpu.concatenate %21, %35 in 0 : vector<4x128xf32>, vector<4x128xf32> -> vector<8x128xf32>
    %37 = vector.shape_cast %36 : vector<8x128xf32> to vector<1x8x128xf32>
    %cst_14 = arith.constant dense<0.000000e+00> : vector<8x128xf32>
    %38 = vector.multi_reduction <add>, %37, %cst_14 [0] : vector<1x8x128xf32> to vector<8x128xf32>
    %39 = vector.shape_cast %26 : vector<8x128xf32> to vector<1x8x128xf32>
    %40 = vector.shape_cast %30 : vector<8x128xf32> to vector<1x8x128xf32>
    %41 = vector.shape_cast %34 : vector<8x128xf32> to vector<1x8x128xf32>
    %42 = vector.shape_cast %38 : vector<8x128xf32> to vector<1x8x128xf32>
    %43 = tpu.concatenate %39, %40, %41, %42 in 0 : vector<1x8x128xf32>, vector<1x8x128xf32>, vector<1x8x128xf32>, vector<1x8x128xf32> -> vector<4x8x128xf32>
    %c0_15 = arith.constant 0 : index
    %c0_16 = arith.constant 0 : index
    %c0_17 = arith.constant 0 : index
    %c0_18 = arith.constant 0 : index
    %44 = vector.load %arg4[%c0_15, %c0_16, %c0_17, %c0_18] : memref<1x4x8x128xf32, #tpu.memory_space<vmem>>, vector<1x4x8x128xf32>
    %45 = vector.shape_cast %43 : vector<4x8x128xf32> to vector<1x4x8x128xf32>
    %46 = arith.addf %44, %45 : vector<1x4x8x128xf32>
    %c0_19 = arith.constant 0 : index
    %c0_20 = arith.constant 0 : index
    %c0_21 = arith.constant 0 : index
    %c0_22 = arith.constant 0 : index
    %47 = vector.load %arg4[%c0_19, %c0_20, %c0_21, %c0_22] : memref<1x4x8x128xf32, #tpu.memory_space<vmem>>, vector<1x4x8x128xf32>
    tpu.vector_store %arg4[%c0_19, %c0_20, %c0_21, %c0_22], %46 {strides = array<i32>} : memref<1x4x8x128xf32, #tpu.memory_space<vmem>>, vector<1x4x8x128xf32>,
    return
  }
  func.func @transform_0(%arg0: i32, %arg1: i32) -> (i32, i32) {
    %c1_i32 = arith.constant 1 : i32
    %0 = arith.muli %arg0, %c1_i32 : i32
    %1 = arith.addi %0, %arg1 : i32
    %c0_i32 = arith.constant 0 : i32
    %2 = arith.minsi %1, %c0_i32 : i32
    %c0_i32_0 = arith.constant 0 : i32
    %c0_i32_1 = arith.constant 0 : i32
    return %2, %c0_i32_0 : i32, i32
  }
  func.func @transform_1(%arg0: i32, %arg1: i32) -> (i32, i32) {
    %c1_i32 = arith.constant 1 : i32
    %0 = arith.muli %arg0, %c1_i32 : i32
    %1 = arith.addi %0, %arg1 : i32
    %c0_i32 = arith.constant 0 : i32
    %2 = arith.minsi %1, %c0_i32 : i32
    %c0_i32_0 = arith.constant 0 : i32
    %c0_i32_1 = arith.constant 0 : i32
    return %2, %c0_i32_0 : i32, i32
  }
  func.func @transform_2(%arg0: i32, %arg1: i32) -> (i32, i32, i32, i32) {
    %c0_i32 = arith.constant 0 : i32
    %c0_i32_0 = arith.constant 0 : i32
    %c0_i32_1 = arith.constant 0 : i32
    %c0_i32_2 = arith.constant 0 : i32
    return %arg0, %c0_i32, %c0_i32_0, %c0_i32_1 : i32, i32, i32, i32
  }
}

</mosaic_0001>

<llo_original>
// kernel: dice_bce_loss.1
$region0: #{dice_bce_loss.1}
  #allocation0 [shape = 'u32[]', space=smem, size = 0x4, offset = 0x4, fixed_abs, tag = 'smem constant byte address 0x4 - core index']
  #allocation1 [shape = 'u32[144,128]{1,0:T(1,128)}', space=vmem, size = 0x12000, scoped, tag = 'internal scratch']
  %s0 = inlined_call_operand.vmem [shape: f32[4,128], index: 0, kind: input, shape index: {}]
  %s1 = inlined_call_operand.vmem [shape: f32[4,128], index: 1, kind: input, shape index: {}]
  %s2 = inlined_call_operand.vmem [shape: f32[1,4,8,128], index: 2, kind: output, shape index: {}]
  %s3 = sld [smem:[#allocation0]]
  $region22: #{dice_bce_loss.1} parent=0
    _
  %s5 = ssub.s32 1, %s3
  %s6 = scalar_select 0, %s5, %s3
  // Predicated region
  $region2: #{dice_bce_loss.1} parent=0 // pred_check
    _
  $region3: #{dice_bce_loss.1} parent=0 // pred_check_branch
    %8 = sbr.rel (0) target = $region5
  $region4: #{dice_bce_loss.1} parent=0 // pred_region
    %s9 = sadd.s32 0, 0
    %p10 = scmp.lt.s32.totalorder %s9, 0
    %s11 = scalar_select %p10, %s9, 0
    %p12 = scmp.lt.s32.totalorder %s11, 0
    %s13 = scalar_select %p12, %s11, 0
    %s14 = smul.addr %s13, 4
    %s15 = scalar_lea.vmem %s0, %s14
    %s16 = sadd.s32 0, 0
    %p17 = scmp.lt.s32.totalorder %s16, 0
    %s18 = scalar_select %p17, %s16, 0
  $region5: #{dice_bce_loss.1} parent=0 // pred_fallthru
    _
  // Predicated region
  $region6: #{dice_bce_loss.1} parent=0 // pred_check
    _
  $region7: #{dice_bce_loss.1} parent=0 // pred_check_branch
    %20 = sbr.rel (0) target = $region9
  $region8: #{dice_bce_loss.1} parent=0 // pred_region
    %s21 = sadd.s32 0, 0
    %p22 = scmp.lt.s32.totalorder %s21, 0
    %s23 = scalar_select %p22, %s21, 0
    %p24 = scmp.lt.s32.totalorder %s23, 0
    %s25 = scalar_select %p24, %s23, 0
    %s26 = smul.addr %s25, 4
    %s27 = scalar_lea.vmem %s1, %s26
    %s28 = sadd.s32 0, 0
    %p29 = scmp.lt.s32.totalorder %s28, 0
    %s30 = scalar_select %p29, %s28, 0
  $region9: #{dice_bce_loss.1} parent=0 // pred_fallthru
    _
  %s31 = sadd.s32 0, 0
  %p32 = scmp.lt.s32.totalorder %s31, 0
  %s33 = scalar_select %p32, %s31, 0
  %p34 = scmp.lt.s32.totalorder %s33, 0
  %s35 = scalar_select %p34, %s33, 0
  %s36 = smul.addr %s35, 4
  %s37 = scalar_lea.vmem %s0, %s36
  %s38 = sadd.s32 0, 0
  %p39 = scmp.lt.s32.totalorder %s38, 0
  %s40 = scalar_select %p39, %s38, 0
  %p41 = scmp.lt.s32.totalorder %s40, 0
  %s42 = scalar_select %p41, %s40, 0
  %s43 = smul.addr %s42, 4
  %s44 = scalar_lea.vmem %s1, %s43
  %s45 = sadd.s32 0, 0
  %p46 = scmp.lt.s32.totalorder %s45, 0
  %s47 = scalar_select %p46, %s45, 0
  %p48 = scmp.lt.s32.totalorder %s47, 0
  %s49 = scalar_select %p48, %s47, 0
  %s50 = smul.addr %s49, 4
  %s51 = scalar_lea.vmem %s0, %s50
  %s52 = sadd.s32 0, 0
  %p53 = scmp.lt.s32.totalorder %s52, 0
  %s54 = scalar_select %p53, %s52, 0
  %s55 = sadd.s32 0, 0
  %p56 = scmp.lt.s32.totalorder %s55, 0
  %s57 = scalar_select %p56, %s55, 0
  %p58 = scmp.lt.s32.totalorder %s57, 0
  %s59 = scalar_select %p58, %s57, 0
  %s60 = smul.addr %s59, 4
  %s61 = scalar_lea.vmem %s1, %s60
  %s62 = sadd.s32 0, 0
  %p63 = scmp.lt.s32.totalorder %s62, 0
  %s64 = scalar_select %p63, %s62, 0
  %p65 = scmp.eq.s32.totalorder 0, 0
  // Predicated region
  $region10: #{dice_bce_loss.1} parent=0 // pred_check
    %p66 = pneg %p65
  $region11: #{dice_bce_loss.1} parent=0 // pred_check_branch
    %68 = sbr.rel (%p66) target = $region13
  $region12: #{dice_bce_loss.1} parent=0 // pred_region
    %69 = vst [vmem:[%s2] sm:$0xff] 0.0
    %70 = vst [vmem:[%s2 + $0x8] sm:$0xff] 0.0
    %71 = vst [vmem:[%s2 + $0x10] sm:$0xff] 0.0
    %72 = vst [vmem:[%s2 + $0x18] sm:$0xff] 0.0
  $region13: #{dice_bce_loss.1} parent=0 // pred_fallthru
    _
  %v73 = vld [vmem:[%s51] sm:$0xf]
  %v74 = vld [vmem:[%s61] sm:$0xf]
  %v75 = vand.u32 2147483647, %v73
  %v76 = vsub.f32 0.0, %v75
  %v77 = vmul.f32 %v76, 1.442695
  %v78 = vpow.pop %v77
  %v79 = vadd.f32 %v78, 1.0
  %v80 = vrcp.pop %v79
  %vm81 = vcmp.ge.f32.partialorder %v73, 0.0
  %v82 = vmul.f32 %v78, %v80
  %v83 = vsel %vm81, %v80, %v82
  %v84 = vmax.f32 %v73, 0.0
  %v85 = vmul.f32 %v73, %v74
  %v86 = vsub.f32 %v84, %v85
  %v87 = vadd.f32 %v78, 1.0
  %v88 = vlog2.pop %v87
  %v89 = vmul.f32 %v88, 0.6931472
  %v90 = vmul.f32 -0.5, %v78
  %v91 = vadd.f32 %v90, 1.0
  %v92 = vmul.f32 %v91, %v78
  %v93 = vand.u32 2147483647, %v78
  %vm94 = vcmp.lt.f32.partialorder %v93, 0.0004427343
  %v95 = vsel %vm94, %v92, %v89
  %v96 = vadd.f32 %v86, %v95
  %v97 = vmul.f32 %v83, %v74
  %vm98 = vcmask 1043456
  %v99 = vsel %vm98, %v97, 0.0
  %v100 = vadd.f32 %v99, 0.0
  %v101 = vsel %vm98, %v83, 0.0
  %v102 = vadd.f32 %v101, 0.0
  %v103 = vsel %vm98, %v74, 0.0
  %v104 = vadd.f32 %v103, 0.0
  %v105 = vsel %vm98, %v96, 0.0
  %v106 = vadd.f32 %v105, 0.0
  %v107 = vld [vmem:[%s2] sm:$0xff]
  %v108 = vld [vmem:[%s2 + $0x8] sm:$0xff]
  %v109 = vld [vmem:[%s2 + $0x10] sm:$0xff]
  %v110 = vld [vmem:[%s2 + $0x18] sm:$0xff]
  %v111 = vadd.f32 %v107, %v100
  %v112 = vadd.f32 %v108, %v102
  %v113 = vadd.f32 %v109, %v104
  %v114 = vadd.f32 %v110, %v106
  %115 = vst [vmem:[%s2] sm:$0xff] %v111
  %116 = vst [vmem:[%s2 + $0x8] sm:$0xff] %v112
  %117 = vst [vmem:[%s2 + $0x10] sm:$0xff] %v113
  %118 = vst [vmem:[%s2 + $0x18] sm:$0xff] %v114
  // Predicated region
  $region14: #{dice_bce_loss.1} parent=0 // pred_check
    _
  $region15: #{dice_bce_loss.1} parent=0 // pred_check_branch
    %120 = sbr.rel (0) target = $region17
  $region16: #{dice_bce_loss.1} parent=0 // pred_region
    _
  $region17: #{dice_bce_loss.1} parent=0 // pred_fallthru
    _
  // Predicated region
  $region18: #{dice_bce_loss.1} parent=0 // pred_check
    _
  $region19: #{dice_bce_loss.1} parent=0 // pred_check_branch
    %122 = sbr.rel (0) target = $region21
  $region20: #{dice_bce_loss.1} parent=0 // pred_region
    _
  $region21: #{dice_bce_loss.1} parent=0 // pred_fallthru
    _

</llo_original>
